<compile_context>
chip_gen: v6e
topology: v6e:2x2x1
jax: 0.10.0
libtpu: 0.0.40
codegen_flags: <defaults>
</compile_context>

<pallas_src>
import functools

import jax
import jax.numpy as jnp
from jax import lax
from jax.experimental import pallas as pl
from jax.experimental.pallas import tpu as pltpu


def _cdiv(a, b):
    return (a + b - 1) // b


def _round_up(x, m):
    return (x + m - 1) // m * m


def _min_sublane(dtype):
    return {4: 8, 2: 16, 1: 32}.get(jnp.dtype(dtype).itemsize, 8)


def _focal_elementwise(x, t, *, alpha, gamma, binary_targets):
    """Elementwise focal loss on an f32 tile (stable BCE-with-logits form)."""
    e = jnp.exp(-jnp.abs(x))                                   # EUP
    bce = jnp.maximum(x, 0.0) - x * t + jnp.log1p(e)           # VALU + EUP

    if binary_targets:
        # Exact closed form of exp(-bce) for t in {0,1}: saves one exp/elem
        # (the binding EUP slot on v7x / bf16); vrcp is near-free.
        match = (t > 0.5) == (x >= 0.0)
        pt = jnp.where(match, 1.0, e) * pl.reciprocal(1.0 + e, approx=True)
    else:
        pt = jnp.exp(-bce)                                      # EUP

    u = jnp.maximum(1.0 - pt, 0.0)   # clamp: pow fallback never sees u < 0

    # Focal modulation (1 - pt)**gamma; integer gamma -> repeated multiply.
    if gamma == 0.0:
        f = bce
    elif float(gamma).is_integer() and 1.0 <= gamma <= 8.0:
        mod = u
        for _ in range(int(gamma) - 1):
            mod = mod * u
        f = mod * bce
    else:
        f = (u ** gamma) * bce

    if alpha != 1.0:
        f = f * jnp.float32(alpha)
    return f


def _focal_loss_kernel(x_ref, t_ref, out_ref, *, alpha, gamma, binary_targets,
                       n_rows, n_cols, block_rows, chunk_cols, mask_rows):
    """One row block -> per-row loss sums, shape (block_rows, 1)."""
    f32 = jnp.float32
    elem = functools.partial(_focal_elementwise, alpha=alpha, gamma=gamma,
                             binary_targets=binary_targets)

    c_full = (n_cols // 128) * 128          # lanes covered by full 128-groups
    rem = n_cols - c_full                   # trailing sub-128 lane group

    row_sum = jnp.zeros((block_rows, 1), f32)

    # Bulk columns: chunked compute + VPU lane-group folds into a (bm,128) acc,
    # then one cross-lane (XLU) reduce per block.
    if c_full > 0:
        acc = jnp.zeros((block_rows, 128), f32)
        for cs in range(0, c_full, chunk_cols):
            w = min(chunk_cols, c_full - cs)
            f = elem(x_ref[:, cs:cs + w].astype(f32),
                     t_ref[:, cs:cs + w].astype(f32))
            for k in range(w // 128):
                acc = acc + f[:, k * 128:(k + 1) * 128]
        row_sum = jnp.sum(acc, axis=-1, keepdims=True)

    # Trailing sub-128 column remainder (at most once per block).
    if rem > 0:
        f = elem(x_ref[:, c_full:n_cols].astype(f32),
                 t_ref[:, c_full:n_cols].astype(f32))
        row_sum = row_sum + jnp.sum(f, axis=-1, keepdims=True)

    # Zero junk rows of the ragged last block.  This is a (block_rows, 1)
    # compare+select — negligible — so it runs unconditionally when any block
    # is ragged; non-last blocks see an all-true mask.
    if mask_rows:
        rows = (lax.broadcasted_iota(jnp.int32, (block_rows, 1), 0)
                + pl.program_id(0) * block_rows)
        row_sum = jnp.where(rows < n_rows, row_sum, 0.0)

    out_ref[...] = row_sum


def multilabel_focal_loss(inputs, targets, *, alpha=1.0, gamma=2.0,
                          reduction="mean", binary_targets=False,
                          target_block_bytes=2 * 1024 * 1024):
    """Forward pass of MultiLabelFocalLoss.  inputs/targets: [N, C].

    For best throughput on HBM-bound v5e/v6e, keep logits and hard targets in
    bf16 (or targets int8) at the producer; compute is f32 internally.
    Set binary_targets=True only for hard {0,1} targets (saves one exp/elem).
    """
    assert inputs.shape == targets.shape and inputs.ndim == 2
    assert reduction in ("mean", "sum")
    n, c = inputs.shape

    min_rows = max(_min_sublane(inputs.dtype), _min_sublane(targets.dtype))

    # Row tile targeting ~target_block_bytes of f32 work per block.
    elems_budget = max(c, target_block_bytes // 4)
    rows_budget = max(min_rows, (elems_budget // c) // min_rows * min_rows)
    # Keep >= 4 row blocks when possible (2 TensorCores x 2 pipeline stages).
    rows_cap = _round_up(_cdiv(n, 4), min_rows)
    block_rows = max(min_rows, min(rows_budget, rows_cap))
    if block_rows >= n:
        block_rows = n        # full-dim block: exempt from sublane divisibility
    num_blocks = _cdiv(n, block_rows)
    mask_rows = (n % block_rows) != 0      # only the last block has junk rows

    c_full = (c // 128) * 128
    chunk_cols = min(512, c_full) if c_full else 128

    kernel = functools.partial(
        _focal_loss_kernel,
        alpha=float(alpha), gamma=float(gamma), binary_targets=binary_targets,
        n_rows=n, n_cols=c, block_rows=block_rows, chunk_cols=chunk_cols,
        mask_rows=mask_rows)

    isz_x = jnp.dtype(inputs.dtype).itemsize
    isz_t = jnp.dtype(targets.dtype).itemsize

    # VMEM: 2x double-buffered input blocks + f32 chunk temporaries + slack.
    in_bytes = block_rows * c * (isz_x + isz_t)
    tmp_bytes = block_rows * max(chunk_cols, 128) * 4 * 8
    vmem_limit = int(min(max(2 * in_bytes + tmp_bytes + (2 << 20), 16 << 20),
                         48 << 20))

    cost = pl.CostEstimate(
        flops=12 * n * c,
        transcendentals=(2 if binary_targets else 3) * n * c,
        bytes_accessed=num_blocks * block_rows * c * (isz_x + isz_t)
        + num_blocks * block_rows * 4)

    partials = pl.pallas_call(
        kernel,
        out_shape=jax.ShapeDtypeStruct((num_blocks * block_rows, 1),
                                       jnp.float32),
        grid_spec=pltpu.PrefetchScalarGridSpec(
            num_scalar_prefetch=0,
            grid=(num_blocks,),
            in_specs=[
                # Last block dim == full C -> no 128 padding needed anywhere.
                pl.BlockSpec((block_rows, c), lambda i: (i, 0)),
                pl.BlockSpec((block_rows, c), lambda i: (i, 0)),
            ],
            out_specs=pl.BlockSpec((block_rows, 1), lambda i: (i, 0)),
        ),
        compiler_params=pltpu.CompilerParams(
            dimension_semantics=("parallel",),       # independent row blocks
            vmem_limit_bytes=vmem_limit,
        ),
        cost_estimate=cost,
    )(inputs, targets)

    total = jnp.sum(partials)
    if reduction == "mean":
        return total / jnp.float32(n * c)
    return total


def _reference(inputs, targets, alpha=1.0, gamma=2.0, reduction="mean"):
    x = inputs.astype(jnp.float32)
    t = targets.astype(jnp.float32)
    bce = jnp.maximum(x, 0.0) - x * t + jnp.log1p(jnp.exp(-jnp.abs(x)))
    pt = jnp.exp(-bce)
    f = alpha * (1.0 - pt) ** gamma * bce
    return f.mean() if reduction == "mean" else f.sum()


if __name__ == "__main__":
    key = jax.random.PRNGKey(0)
    k1, k2, k3, k4 = jax.random.split(key, 4)

    # Test 1: aligned shapes, f32, defaults (alpha=1, gamma=2, mean).
    n, c = 16, 128
    logits = jax.random.normal(k1, (n, c), dtype=jnp.float32) * 2.0
    tgts = (jax.random.uniform(k2, (n, c)) > 0.5).astype(jnp.float32)
    out = jax.block_until_ready(multilabel_focal_loss(logits, tgts))
    ref = _reference(logits, tgts)
    assert jnp.allclose(out, ref, rtol=1e-4, atol=1e-6), (out, ref)

    # Test 2: unaligned N and C (ragged row block + sub-128 lane remainder),
    # 'sum' reduction, alpha=0.25.
    n2, c2 = 10, 200
    logits2 = jax.random.normal(k3, (n2, c2), dtype=jnp.float32)
    tgts2 = (jax.random.uniform(k4, (n2, c2)) > 0.7).astype(jnp.float32)
    out2 = jax.block_until_ready(
        multilabel_focal_loss(logits2, tgts2, alpha=0.25, reduction="sum"))
    ref2 = _reference(logits2, tgts2, alpha=0.25, reduction="sum")
    assert jnp.allclose(out2, ref2, rtol=1e-4, atol=1e-6), (out2, ref2)

    # Test 3: bf16 logits (halved HBM traffic) + non-integer gamma (pow path).
    logits3 = logits.astype(jnp.bfloat16)
    out3 = jax.block_until_ready(multilabel_focal_loss(logits3, tgts, gamma=1.5))
    ref3 = _reference(logits3, tgts, gamma=1.5)
    assert jnp.allclose(out3, ref3, rtol=1e-3, atol=1e-5), (out3, ref3)

    # Test 4: binary-target fast path (one fewer exp/elem, approx reciprocal).
    out4 = jax.block_until_ready(
        multilabel_focal_loss(logits, tgts, binary_targets=True))
    ref4 = _reference(logits, tgts)
    assert jnp.allclose(out4, ref4, rtol=2e-3, atol=1e-5), (out4, ref4)

    print("KERNEL_OK")
</pallas_src>

<mosaic_0001>
module attributes {stable_mosaic.version = 11 : i64} {
  func.func @_focal_loss_kernel(%arg0: i32, %arg1: memref<8x128xf32, #tpu.memory_space<vmem>>, %arg2: memref<8x128xf32, #tpu.memory_space<vmem>>, %arg3: memref<8x1xf32, #tpu.memory_space<vmem>>) attributes {dimension_semantics = [#tpu.dimension_semantics<parallel>], iteration_bounds = array<i64: 2>, scalar_prefetch = 0 : i64, scratch_operands = 0 : i64, tpu.core_type = #tpu.core_type<tc>, window_params = [{transform_indices = @transform_0, window_bounds = array<i64: 8, 128>}, {transform_indices = @transform_1, window_bounds = array<i64: 8, 128>}, {transform_indices = @transform_2, window_bounds = array<i64: 8, 1>}]} {
    %cst = arith.constant 0.000000e+00 : f32
    %0 = vector.broadcast %cst : f32 to vector<8x128xf32>
    %c0 = arith.constant 0 : index
    %c0_0 = arith.constant 0 : index
    %1 = vector.load %arg1[%c0, %c0_0] : memref<8x128xf32, #tpu.memory_space<vmem>>, vector<8x128xf32>
    %c0_1 = arith.constant 0 : index
    %c0_2 = arith.constant 0 : index
    %2 = vector.load %arg2[%c0_1, %c0_2] : memref<8x128xf32, #tpu.memory_space<vmem>>, vector<8x128xf32>
    %3 = math.absf %1 : vector<8x128xf32>
    %cst_3 = arith.constant 0.000000e+00 : f32
    %4 = vector.broadcast %cst_3 : f32 to vector<8x128xf32>
    %5 = arith.subf %4, %3 : vector<8x128xf32>
    %6 = math.exp %5 : vector<8x128xf32>
    %cst_4 = arith.constant 0.000000e+00 : f32
    %7 = vector.broadcast %cst_4 : f32 to vector<8x128xf32>
    %8 = arith.maximumf %1, %7 : vector<8x128xf32>
    %9 = arith.mulf %1, %2 : vector<8x128xf32>
    %10 = arith.subf %8, %9 : vector<8x128xf32>
    %11 = math.log1p %6 : vector<8x128xf32>
    %12 = arith.addf %10, %11 : vector<8x128xf32>
    %cst_5 = arith.constant 0.000000e+00 : f32
    %13 = vector.broadcast %cst_5 : f32 to vector<8x128xf32>
    %14 = arith.subf %13, %12 : vector<8x128xf32>
    %15 = math.exp %14 : vector<8x128xf32>
    %cst_6 = arith.constant 1.000000e+00 : f32
    %16 = vector.broadcast %cst_6 : f32 to vector<8x128xf32>
    %17 = arith.subf %16, %15 : vector<8x128xf32>
    %cst_7 = arith.constant 0.000000e+00 : f32
    %18 = vector.broadcast %cst_7 : f32 to vector<8x128xf32>
    %19 = arith.maximumf %17, %18 : vector<8x128xf32>
    %20 = arith.mulf %19, %19 : vector<8x128xf32>
    %21 = arith.mulf %20, %12 : vector<8x128xf32>
    %22 = arith.addf %0, %21 : vector<8x128xf32>
    %cst_8 = arith.constant dense<0.000000e+00> : vector<8xf32>
    %23 = vector.multi_reduction <add>, %22, %cst_8 [1] : vector<8x128xf32> to vector<8xf32>
    %24 = vector.shape_cast %23 : vector<8xf32> to vector<8x1xf32>
    %c0_9 = arith.constant 0 : index
    %c0_10 = arith.constant 0 : index
    %25 = vector.load %arg3[%c0_9, %c0_10] : memref<8x1xf32, #tpu.memory_space<vmem>>, vector<8x1xf32>
    tpu.vector_store %arg3[%c0_9, %c0_10], %24 {strides = array<i32>} : memref<8x1xf32, #tpu.memory_space<vmem>>, vector<8x1xf32>,
    return
  }
  func.func @transform_0(%arg0: i32) -> (i32, i32) {
    %c0_i32 = arith.constant 0 : i32
    %c0_i32_0 = arith.constant 0 : i32
    return %arg0, %c0_i32 : i32, i32
  }
  func.func @transform_1(%arg0: i32) -> (i32, i32) {
    %c0_i32 = arith.constant 0 : i32
    %c0_i32_0 = arith.constant 0 : i32
    return %arg0, %c0_i32 : i32, i32
  }
  func.func @transform_2(%arg0: i32) -> (i32, i32) {
    %c0_i32 = arith.constant 0 : i32
    %c0_i32_0 = arith.constant 0 : i32
    return %arg0, %c0_i32 : i32, i32
  }
}

</mosaic_0001>

<llo_original>
// kernel: tpu_custom_call.1
$region0: #{tpu_custom_call.1}
  #allocation0 [shape = 'u32[]', space=smem, size = 0x4, offset = 0x4, fixed_abs, tag = 'smem constant byte address 0x4 - core index']
  #allocation1 [shape = 'u32[144,128]{1,0:T(1,128)}', space=vmem, size = 0x12000, scoped, tag = 'internal scratch']
  %s0 = inlined_call_operand.hbm [shape: f32[16,128], index: 0, kind: input, shape index: {}]
  %s1 = inlined_call_operand.hbm [shape: f32[16,128], index: 1, kind: input, shape index: {}]
  %s2 = inlined_call_operand.vmem [shape: f32[16,1], index: 2, kind: output, shape index: {}]
  %s3 = sld [smem:[#allocation0]]
  $region49: #{tpu_custom_call.1} parent=0
    _
  %s5 = ssub.s32 1, %s3
  %s6 = scalar_select 0, %s5, %s3
  $region1: #{tpu_custom_call.1} parent=0
    #allocation2 [shape = 'u8[8192]{0}', space=vmem, size = 0x2000, scoped, tag = 'input window, operand 0']
    #allocation3 [shape = 's32[2]{0}', space=sflag, size = 0x8, scoped, tag = 'scoped memory for tpu_custom_call.1']
    #allocation4 [shape = 'u8[8192]{0}', space=vmem, size = 0x2000, scoped, tag = 'input window, operand 1']
    #allocation5 [shape = 's32[2]{0}', space=sflag, size = 0x8, scoped, tag = 'scoped memory for tpu_custom_call.1']
    %7 = vsyncpa [#allocation3], 0
    %s8 = scalar_lea.sflag [#allocation3], 1
    %9 = vsyncpa %s8, 0
    %10 = vsyncpa [#allocation5], 0
    %s11 = scalar_lea.sflag [#allocation5], 1
    %12 = vsyncpa %s11, 0
    loop: start=0, step=1, limit=4
    $region2: #{tpu_custom_call.1} parent=1 // loop_pre_header
      _
    $region3: #{tpu_custom_call.1} parent=1 // loop_header
      %s14 = sphi 0, %s18
      %p15 = scmp.ge.s32.totalorder %s14, 4
      %s24 = sphi 0, %s26
      %s27 = sphi 0, %s24
      %s28 = sphi 0, %s27
      %s44 = sphi 0, %s28
      %s50 = sphi 0, %s52
      %s53 = sphi 0, %s50
      %s54 = sphi 0, %s53
      %s70 = sphi 0, %s54
      %s76 = sphi 0, %s78
      %s79 = sphi 0, %s76
      %s80 = sphi 0, %s79
      %s96 = sphi 0, %s80
    $region4: #{tpu_custom_call.1} parent=1 // loop_header_branch
      %17 = sbr.rel (%p15) target = $region8
    $region5: #{tpu_custom_call.1} parent=1 // loop_body
      %s19 = ssub.s32 %s14, 1
      %s20 = ssub.s32 %s14, 2
      %s21 = sadd.s32 %s14, 1
      %s22 = ssub.s32 %s14, %s21
      %p23 = scmp.eq.s32.totalorder %s22, 0
      %s25 = sadd.s32 %s24, 1
      %s26 = scalar_select %p23, %s24, %s25
      %p29 = pneg %p23
      %p30 = scmp.eq.s32.totalorder %s14, 1
      %p31 = por %p29, %p30
      %p32 = scmp.ne.s32.totalorder %s24, %s27
      %p33 = scmp.eq.s32.totalorder %s14, 0
      %p34 = por %p32, %p33
      %p35 = scmp.ne.s32.totalorder %s24, %s27
      %p36 = scmp.eq.s32.totalorder %s19, 1
      %p37 = por %p35, %p36
      %p38 = scmp.ne.s32.totalorder %s27, %s28
      %p39 = scmp.eq.s32.totalorder %s19, 0
      %p40 = por %p38, %p39
      %p41 = scmp.ne.s32.totalorder %s27, %s28
      %p42 = scmp.eq.s32.totalorder %s20, 1
      %p43 = por %p41, %p42
      %p45 = scmp.ne.s32.totalorder %s28, %s44
      %p46 = scmp.eq.s32.totalorder %s20, 0
      %p47 = por %p45, %p46
      %s48 = ssub.s32 %s14, %s21
      %p49 = scmp.eq.s32.totalorder %s48, 0
      %s51 = sadd.s32 %s50, 1
      %s52 = scalar_select %p49, %s50, %s51
      %p55 = pneg %p49
      %p56 = scmp.eq.s32.totalorder %s14, 1
      %p57 = por %p55, %p56
      %p58 = scmp.ne.s32.totalorder %s50, %s53
      %p59 = scmp.eq.s32.totalorder %s14, 0
      %p60 = por %p58, %p59
      %p61 = scmp.ne.s32.totalorder %s50, %s53
      %p62 = scmp.eq.s32.totalorder %s19, 1
      %p63 = por %p61, %p62
      %p64 = scmp.ne.s32.totalorder %s53, %s54
      %p65 = scmp.eq.s32.totalorder %s19, 0
      %p66 = por %p64, %p65
      %p67 = scmp.ne.s32.totalorder %s53, %s54
      %p68 = scmp.eq.s32.totalorder %s20, 1
      %p69 = por %p67, %p68
      %p71 = scmp.ne.s32.totalorder %s54, %s70
      %p72 = scmp.eq.s32.totalorder %s20, 0
      %p73 = por %p71, %p72
      %s74 = ssub.s32 %s14, %s21
      %p75 = scmp.eq.s32.totalorder %s74, 0
      %s77 = sadd.s32 %s76, 1
      %s78 = scalar_select %p75, %s76, %s77
      %p81 = pneg %p75
      %p82 = scmp.eq.s32.totalorder %s14, 1
      %p83 = por %p81, %p82
      %p84 = scmp.ne.s32.totalorder %s76, %s79
      %p85 = scmp.eq.s32.totalorder %s14, 0
      %p86 = por %p84, %p85
      %p87 = scmp.ne.s32.totalorder %s76, %s79
      %p88 = scmp.eq.s32.totalorder %s19, 1
      %p89 = por %p87, %p88
      %p90 = scmp.ne.s32.totalorder %s79, %s80
      %p91 = scmp.eq.s32.totalorder %s19, 0
      %p92 = por %p90, %p91
      %p93 = scmp.ne.s32.totalorder %s79, %s80
      %p94 = scmp.eq.s32.totalorder %s20, 1
      %p95 = por %p93, %p94
      %p97 = scmp.ne.s32.totalorder %s80, %s96
      %p98 = scmp.eq.s32.totalorder %s20, 0
      %p99 = por %p97, %p98
      %p100 = scmp.le.s32.totalorder 1, %s14
      %p101 = scmp.lt.s32.totalorder %s14, 3
      %p102 = pnand %p100, %p101
      %p103 = pneg %p102
      // Predicated region
      $region9: #{tpu_custom_call.1} parent=5 // pred_check
        _
      $region10: #{tpu_custom_call.1} parent=5 // pred_check_branch
        %105 = sbr.rel (%p102) target = $region12
      $region11: #{tpu_custom_call.1} parent=5 // pred_region
        %s106 = ssub.s32 %s14, 1
      $region12: #{tpu_custom_call.1} parent=5 // pred_fallthru
        _
      %p107 = scmp.lt.s32.totalorder %s14, 2
      // Predicated region
      $region13: #{tpu_custom_call.1} parent=5 // pred_check
        %p108 = pneg %p107
      $region14: #{tpu_custom_call.1} parent=5 // pred_check_branch
        %110 = sbr.rel (%p108) target = $region16
      $region15: #{tpu_custom_call.1} parent=5 // pred_region
        // Predicated region
        $region17: #{tpu_custom_call.1} parent=15 // pred_check
          %p111 = pneg %p34
        $region18: #{tpu_custom_call.1} parent=15 // pred_check_branch
          %113 = sbr.rel (%p111) target = $region20
        $region19: #{tpu_custom_call.1} parent=15 // pred_region
          %s114 = sand.u32 %s24, 1
          %s115 = scalar_lea.sflag [#allocation3], %s114
          %s116 = sand.u32 %s24, 1
          %s117 = smul.addr %s116, 8
          %s118 = scalar_lea.vmem [#allocation2], %s117
          %s120 = ssub.s32 128, 128
          %121 = vsyncadd %s115, %s120
          %s122 = smul.addr %s14, 128
          %s123 = scalar_lea.hbm %s0, %s122
          %s125 = sshll.u32 %s118, 4
          %s126 = int_to_ptr.vmem [resolvable:$true] %s125
          %128 = dma.hbm_to_vmem [thread:$0]  %s123, 128, %s126, %s115
        $region20: #{tpu_custom_call.1} parent=15 // pred_fallthru
          _
        // Predicated region
        $region21: #{tpu_custom_call.1} parent=15 // pred_check
          %p129 = pneg %p60
        $region22: #{tpu_custom_call.1} parent=15 // pred_check_branch
          %131 = sbr.rel (%p129) target = $region24
        $region23: #{tpu_custom_call.1} parent=15 // pred_region
          %s132 = sand.u32 %s50, 1
          %s133 = scalar_lea.sflag [#allocation5], %s132
          %s134 = sand.u32 %s50, 1
          %s135 = smul.addr %s134, 8
          %s136 = scalar_lea.vmem [#allocation4], %s135
          %s138 = ssub.s32 128, 128
          %139 = vsyncadd %s133, %s138
          %s140 = smul.addr %s14, 128
          %s141 = scalar_lea.hbm %s1, %s140
          %s143 = sshll.u32 %s136, 4
          %s144 = int_to_ptr.vmem [resolvable:$true] %s143
          %146 = dma.hbm_to_vmem [thread:$0]  %s141, 128, %s144, %s133
        $region24: #{tpu_custom_call.1} parent=15 // pred_fallthru
          _
      $region16: #{tpu_custom_call.1} parent=5 // pred_fallthru
        _
      %p147 = scmp.le.s32.totalorder 1, %s14
      %p148 = scmp.lt.s32.totalorder %s14, 3
      %p149 = pnand %p147, %p148
      %p150 = pneg %p149
      // Predicated region
      $region25: #{tpu_custom_call.1} parent=5 // pred_check
        _
      $region26: #{tpu_custom_call.1} parent=5 // pred_check_branch
        %152 = sbr.rel (%p149) target = $region28
      $region27: #{tpu_custom_call.1} parent=5 // pred_region
        %s153 = ssub.s32 %s14, 1
        %s154 = sand.u32 %s27, 1
        %s155 = scalar_lea.sflag [#allocation3], %s154
        %s156 = sand.u32 %s27, 1
        %s157 = smul.addr %s156, 8
        %s158 = scalar_lea.vmem [#allocation2], %s157
        // Predicated region
        $region29: #{tpu_custom_call.1} parent=27 // pred_check
          %p159 = pneg %p40
        $region30: #{tpu_custom_call.1} parent=27 // pred_check_branch
          %161 = sbr.rel (%p159) target = $region32
        $region31: #{tpu_custom_call.1} parent=27 // pred_region
          %162 = dma.done %s155, 128
        $region32: #{tpu_custom_call.1} parent=27 // pred_fallthru
          _
        %s163 = sand.u32 %s53, 1
        %s164 = scalar_lea.sflag [#allocation5], %s163
        %s165 = sand.u32 %s53, 1
        %s166 = smul.addr %s165, 8
        %s167 = scalar_lea.vmem [#allocation4], %s166
        // Predicated region
        $region33: #{tpu_custom_call.1} parent=27 // pred_check
          %p168 = pneg %p66
        $region34: #{tpu_custom_call.1} parent=27 // pred_check_branch
          %170 = sbr.rel (%p168) target = $region36
        $region35: #{tpu_custom_call.1} parent=27 // pred_region
          %171 = dma.done %s164, 128
        $region36: #{tpu_custom_call.1} parent=27 // pred_fallthru
          _
        %s172 = sand.u32 %s27, 1
        %s173 = scalar_lea.sflag [#allocation3], %s172
        %s174 = sand.u32 %s27, 1
        %s175 = smul.addr %s174, 8
        %s176 = scalar_lea.vmem [#allocation2], %s175
        %p177 = pneg %p40
        %p178 = pneg %p37
        %s179 = sand.u32 %s53, 1
        %s180 = scalar_lea.sflag [#allocation5], %s179
        %s181 = sand.u32 %s53, 1
        %s182 = smul.addr %s181, 8
        %s183 = scalar_lea.vmem [#allocation4], %s182
        %p184 = pneg %p66
        %p185 = pneg %p63
        %p186 = pneg %p92
        %p187 = pneg %p89
        %p188 = scmp.lt.s32.totalorder %s19, 1
        %s189 = scalar_select %p188, %s19, 1
        %s190 = smul.addr %s189, 8
        %s191 = scalar_lea.vmem %s2, %s190
        %p192 = scmp.lt.s32.totalorder %s19, 1
        %s193 = scalar_select %p192, %s19, 1
        %s194 = smul.addr %s193, 8
        %s195 = scalar_lea.vmem %s2, %s194
        %v196 = vld [vmem:[%s158] sm:$0xff]
        %v197 = vld [vmem:[%s167] sm:$0xff]
        %v198 = vand.u32 2147483647, %v196
        %v199 = vsub.f32 0.0, %v198
        %v200 = vmul.f32 %v199, 1.442695
        %v201 = vpow.pop %v200
        %v202 = vmax.f32 %v196, 0.0
        %v203 = vmul.f32 %v196, %v197
        %v204 = vsub.f32 %v202, %v203
        %v205 = vadd.f32 %v201, 1.0
        %v206 = vlog2.pop %v205
        %v207 = vmul.f32 %v206, 0.6931472
        %v208 = vmul.f32 -0.5, %v201
        %v209 = vadd.f32 %v208, 1.0
        %v210 = vmul.f32 %v209, %v201
        %v211 = vand.u32 2147483647, %v201
        %vm212 = vcmp.lt.f32.partialorder %v211, 0.0004427343
        %v213 = vsel %vm212, %v210, %v207
        %v214 = vadd.f32 %v204, %v213
        %v215 = vsub.f32 0.0, %v214
        %v216 = vmul.f32 %v215, 1.442695
        %v217 = vpow.pop %v216
        %v218 = vsub.f32 1.0, %v217
        %v219 = vmax.f32 %v218, 0.0
        %v220 = vmul.f32 %v219, %v219
        %v221 = vmul.f32 %v220, %v214
        %v222 = vadd.f32 %v221, 0.0
        %223 = vadd.xlane.f32.xlu0 %v222
        %v224 = vpop.xlane.xlu0 %223
        %vm225 = vcmask 7168
        %226 = vst.msk [vmem:[%s195] sm:$0xff] %vm225, %v224
        %p227 = scmp.lt.s32.totalorder %s19, 1
        %s228 = scalar_select %p227, %s19, 1
        %s229 = smul.addr %s228, 8
        %s230 = scalar_lea.vmem %s2, %s229
        // Predicated region
        $region37: #{tpu_custom_call.1} parent=27 // pred_check
          %p231 = pneg %p89
        $region38: #{tpu_custom_call.1} parent=27 // pred_check_branch
          %233 = sbr.rel (%p231) target = $region40
        $region39: #{tpu_custom_call.1} parent=27 // pred_region
          _
        $region40: #{tpu_custom_call.1} parent=27 // pred_fallthru
          _
      $region28: #{tpu_custom_call.1} parent=5 // pred_fallthru
        _
      %p234 = scmp.le.s32.totalorder 2, %s14
      // Predicated region
      $region41: #{tpu_custom_call.1} parent=5 // pred_check
        %p235 = pneg %p234
      $region42: #{tpu_custom_call.1} parent=5 // pred_check_branch
        %237 = sbr.rel (%p235) target = $region44
      $region43: #{tpu_custom_call.1} parent=5 // pred_region
        %s238 = ssub.s32 %s14, 2
        // Predicated region
        $region45: #{tpu_custom_call.1} parent=43 // pred_check
          %p239 = pneg %p95
        $region46: #{tpu_custom_call.1} parent=43 // pred_check_branch
          %241 = sbr.rel (%p239) target = $region48
        $region47: #{tpu_custom_call.1} parent=43 // pred_region
          %p242 = scmp.lt.s32.totalorder %s20, 1
          %s243 = scalar_select %p242, %s20, 1
          %s244 = smul.addr %s243, 8
          %s245 = scalar_lea.vmem %s2, %s244
        $region48: #{tpu_custom_call.1} parent=43 // pred_fallthru
          _
      $region44: #{tpu_custom_call.1} parent=5 // pred_fallthru
        _
    $region6: #{tpu_custom_call.1} parent=1 // loop_footer
      %s18 = sadd.s32 1, %s14
    $region7: #{tpu_custom_call.1} parent=1 // loop_footer_branch
      %13 = sbr.rel target = $region3
    $region8: #{tpu_custom_call.1} parent=1 // loop_exit
      _
    %246 = vsyncpa [#allocation3], 1
    %s247 = scalar_lea.sflag [#allocation3], 1
    %248 = vsyncpa %s247, 1
    %249 = vsyncpa [#allocation5], 1
    %s250 = scalar_lea.sflag [#allocation5], 1
    %251 = vsyncpa %s250, 1

</llo_original>
